<compile_context>
chip_gen: v5e
topology: v5e:2x2
jax: 0.10.0
libtpu: 0.0.40
codegen_flags: <defaults>
</compile_context>

<pallas_src>
import jax
import jax.numpy as jnp
from jax.experimental import pallas as pl
from jax.experimental.pallas import tpu as pltpu


def _ceil_to(a, b):
    return -(-a // b) * b


def _cdiv(a, b):
    return -(-a // b)


def _conv1x1_bn_relu_kernel(x_ref, w_ref, b_ref, o_ref):
    # x_ref: (nb, Cin, tile_hw)   nb images; channels on sublanes, pixels on lanes
    # w_ref: (co_tile, Cin)       BN-scale-folded 1x1 conv weight
    # b_ref: (co_tile, 1)         folded BN bias (f32)
    # o_ref: (nb, co_tile, tile_hw)
    w = w_ref[...]
    b = b_ref[...]
    for n in range(x_ref.shape[0]):          # static unroll over the image block
        y = jnp.dot(w, x_ref[n], preferred_element_type=jnp.float32)
        o_ref[n] = jnp.maximum(y + b, 0.0).astype(o_ref.dtype)


def conv1x1_branch(x_nchw, weight, gamma, beta, running_mean, running_var,
                   *, bn_eps=1e-5, tile_hw=None, out_dtype=None):
    """Forward pass of Conv1x1Branch (Conv1x1 -> eval BN -> ReLU).

    x_nchw: (N, Cin, H, W); dot operands use x's dtype as-is (pass bf16 to
            halve input HBM traffic).  Accumulation / epilogue are f32.
    weight: (Cout, Cin, 1, 1) PyTorch Conv2d layout.
    gamma/beta/running_mean/running_var: (Cout,) eval-mode BN stats.
    out_dtype: output dtype (defaults to x's dtype).
    """
    N, Cin, H, W = x_nchw.shape
    Cout = weight.shape[0]
    HW = H * W

    out_dtype = x_nchw.dtype if out_dtype is None else out_dtype
    x_itemsize = jnp.dtype(x_nchw.dtype).itemsize
    out_itemsize = jnp.dtype(out_dtype).itemsize
    w_itemsize = x_itemsize  # weight cast to x's dtype below

    # Physical VMEM (per core) gates tile defaults and the scoped limit.
    try:
        vmem_cap = int(pltpu.get_tpu_info().vmem_capacity_bytes)
    except Exception:  # interpret mode / unknown chip: assume v7x's 64 MiB
        vmem_cap = 64 * 1024 * 1024

    if tile_hw is None:
        tile_hw = 2048 if vmem_cap >= 96 * 1024 * 1024 else 1024  # v5e/v6e vs v7x
    assert tile_hw % 128 == 0, "tile_hw must be a multiple of 128 lanes"

    # --- HW tiling: fewest tiles <= tile_hw, tile rounded up to 128 lanes ----
    hw_tiles = _cdiv(HW, tile_hw)
    tile = _ceil_to(_cdiv(HW, hw_tiles), 128)
    hw_tiles = _cdiv(HW, tile)          # ragged last tile handled by Pallas

    # --- Cout tiling: keep the weight block <= ~4 MiB --------------------------
    co_cap_bytes = 4 * 1024 * 1024
    if Cout * Cin * w_itemsize > co_cap_bytes and Cout > 128:
        co_tile = max(128, (co_cap_bytes // (Cin * w_itemsize)) // 128 * 128)
        co_tile = min(co_tile, _ceil_to(Cout, 128))
    else:
        co_tile = Cout                   # full weight stays resident
    co_tiles = _cdiv(Cout, co_tile)

    # --- Pack several images per step when the per-image tile is tiny ---------
    per_image_step_bytes = (Cin * x_itemsize + co_tile * out_itemsize) * tile
    nb = max(1, min(N, 8, (1 << 20) // max(per_image_step_bytes, 1)))
    n_steps = _cdiv(N, nb)

    # --- Fold eval-mode BN into the conv weight and a per-channel bias --------
    scale = (gamma.astype(jnp.float32)
             / jnp.sqrt(running_var.astype(jnp.float32) + bn_eps))        # (Cout,)
    bias = (beta.astype(jnp.float32)
            - running_mean.astype(jnp.float32) * scale)                   # (Cout,)
    w_mat = (weight.reshape(Cout, Cin).astype(jnp.float32)
             * scale[:, None]).astype(x_nchw.dtype)                       # (Cout, Cin)
    bias2d = bias.reshape(Cout, 1)

    # NCHW stays NCHW: flatten spatial dims onto lanes (free, no pad, no cast).
    x_flat = x_nchw.reshape(N, Cin, HW)

    # --- BlockSpecs ------------------------------------------------------------
    x_spec = pl.BlockSpec((nb, Cin, tile), lambda j, c, n: (n, 0, j))
    o_spec = pl.BlockSpec((nb, co_tile, tile), lambda j, c, n: (n, c, j))

    w_block_bytes = co_tile * Cin * w_itemsize
    if co_tiles == 1 and w_block_bytes > (2 * 1024 * 1024):
        # Constant index map + large block: single-buffer it (DMA'd once) to
        # halve the resident-weight VMEM on v7x.  For small weights the
        # default double-buffering is harmless, so keep it there.
        w_spec = pl.BlockSpec((co_tile, Cin), lambda j, c, n: (0, 0),
                              pipeline_mode=pl.Buffered(1))
        b_spec = pl.BlockSpec((co_tile, 1), lambda j, c, n: (0, 0),
                              pipeline_mode=pl.Buffered(1))
        w_bufs = 1
    else:
        w_spec = pl.BlockSpec((co_tile, Cin), lambda j, c, n: (c, 0))
        b_spec = pl.BlockSpec((co_tile, 1), lambda j, c, n: (c, 0))
        w_bufs = 2

    # --- VMEM budget from actual block shapes (clamped to 3/4 physical) -------
    x_blk = nb * Cin * tile * x_itemsize
    o_blk = nb * co_tile * tile * out_itemsize
    w_blk = co_tile * Cin * w_itemsize + co_tile * 4
    vmem_need = 2 * (x_blk + o_blk) + w_bufs * w_blk
    vmem_limit = int(min(max(vmem_need + vmem_need // 4 + (4 << 20), 32 << 20),
                         vmem_cap * 3 // 4))

    out_flat = pl.pallas_call(
        _conv1x1_bn_relu_kernel,
        out_shape=jax.ShapeDtypeStruct((N, Cout, HW), out_dtype),
        grid_spec=pltpu.PrefetchScalarGridSpec(
            num_scalar_prefetch=0,
            grid=(hw_tiles, co_tiles, n_steps),   # HW leading: v7x TCs shard pixels
            in_specs=[x_spec, w_spec, b_spec],
            out_specs=o_spec,
        ),
        compiler_params=pltpu.CompilerParams(
            dimension_semantics=("parallel", "parallel", "parallel"),
            vmem_limit_bytes=vmem_limit,
        ),
    )(x_flat, w_mat, bias2d)

    return out_flat.reshape(N, Cout, H, W)


if __name__ == "__main__":
    key = jax.random.PRNGKey(0)
    N, Cin, H, W = 2, 4, 16, 16
    Cout = 8

    k_x, k_w, k_g, k_b, k_m, k_v = jax.random.split(key, 6)
    x = jax.random.normal(k_x, (N, Cin, H, W), dtype=jnp.float32)
    weight = jax.random.normal(k_w, (Cout, Cin, 1, 1), dtype=jnp.float32) * 0.1
    gamma = 1.0 + 0.1 * jax.random.normal(k_g, (Cout,), dtype=jnp.float32)
    beta = 0.1 * jax.random.normal(k_b, (Cout,), dtype=jnp.float32)
    running_mean = 0.05 * jax.random.normal(k_m, (Cout,), dtype=jnp.float32)
    running_var = jnp.abs(1.0 + 0.1 * jax.random.normal(k_v, (Cout,), dtype=jnp.float32))

    out = conv1x1_branch(x, weight, gamma, beta, running_mean, running_var)
    jax.block_until_ready(out)

    # Reference check in plain JAX (same eval-mode BN math).
    scale = gamma / jnp.sqrt(running_var + 1e-5)
    bias = beta - running_mean * scale
    y_ref = jnp.einsum('nihw,oi->nohw', x, weight.reshape(Cout, Cin))
    y_ref = jnp.maximum(y_ref * scale[None, :, None, None]
                        + bias[None, :, None, None], 0.0)
    assert out.shape == (N, Cout, H, W)
    assert jnp.allclose(out, y_ref, atol=1e-4, rtol=1e-4)

    print("KERNEL_OK")
</pallas_src>

<mosaic_0001>
module attributes {stable_mosaic.version = 11 : i64} {
  func.func @_conv1x1_bn_relu_kernel(%arg0: i32, %arg1: i32, %arg2: i32, %arg3: memref<2x4x256xf32, #tpu.memory_space<vmem>>, %arg4: memref<8x4xf32, #tpu.memory_space<vmem>>, %arg5: memref<8x1xf32, #tpu.memory_space<vmem>>, %arg6: memref<2x8x256xf32, #tpu.memory_space<vmem>>) attributes {dimension_semantics = [#tpu.dimension_semantics<parallel>, #tpu.dimension_semantics<parallel>, #tpu.dimension_semantics<parallel>], iteration_bounds = array<i64: 1, 1, 1>, scalar_prefetch = 0 : i64, scratch_operands = 0 : i64, tpu.core_type = #tpu.core_type<tc>, window_params = [{transform_indices = @transform_0, window_bounds = array<i64: 2, 4, 256>}, {transform_indices = @transform_1, window_bounds = array<i64: 8, 4>}, {transform_indices = @transform_2, window_bounds = array<i64: 8, 1>}, {transform_indices = @transform_3, window_bounds = array<i64: 2, 8, 256>}]} {
    %c0 = arith.constant 0 : index
    %c0_0 = arith.constant 0 : index
    %0 = vector.load %arg4[%c0, %c0_0] : memref<8x4xf32, #tpu.memory_space<vmem>>, vector<8x4xf32>
    %c0_1 = arith.constant 0 : index
    %c0_2 = arith.constant 0 : index
    %1 = vector.load %arg5[%c0_1, %c0_2] : memref<8x1xf32, #tpu.memory_space<vmem>>, vector<8x1xf32>
    %c0_3 = arith.constant 0 : index
    %c0_4 = arith.constant 0 : index
    %c0_5 = arith.constant 0 : index
    %2 = vector.load %arg3[%c0_3, %c0_4, %c0_5] : memref<2x4x256xf32, #tpu.memory_space<vmem>>, vector<1x4x256xf32>
    %3 = vector.shape_cast %2 : vector<1x4x256xf32> to vector<4x256xf32>
    %cst = arith.constant dense<0.000000e+00> : vector<8x256xf32>
    %4 = tpu.matmul %0, %3, %cst {dimension_numbers = #tpu.dot_dimension_numbers<[1], [0], [0], [1], [0, 0, 1, 1], [], []>} : vector<8x4xf32>, vector<4x256xf32>, vector<8x256xf32> -> vector<8x256xf32>
    %5 = vector.broadcast %1 : vector<8x1xf32> to vector<8x256xf32>
    %6 = arith.addf %4, %5 : vector<8x256xf32>
    %cst_6 = arith.constant 0.000000e+00 : f32
    %7 = vector.broadcast %cst_6 : f32 to vector<8x256xf32>
    %8 = arith.maximumf %6, %7 : vector<8x256xf32>
    %c0_7 = arith.constant 0 : index
    %c0_8 = arith.constant 0 : index
    %c0_9 = arith.constant 0 : index
    %9 = vector.load %arg6[%c0_7, %c0_8, %c0_9] : memref<2x8x256xf32, #tpu.memory_space<vmem>>, vector<1x8x256xf32>
    %10 = vector.shape_cast %9 : vector<1x8x256xf32> to vector<8x256xf32>
    %11 = vector.shape_cast %8 : vector<8x256xf32> to vector<1x8x256xf32>
    tpu.vector_store %arg6[%c0_7, %c0_8, %c0_9], %11 {strides = array<i32>} : memref<2x8x256xf32, #tpu.memory_space<vmem>>, vector<1x8x256xf32>,
    %c1 = arith.constant 1 : index
    %c0_10 = arith.constant 0 : index
    %c0_11 = arith.constant 0 : index
    %12 = vector.load %arg3[%c1, %c0_10, %c0_11] : memref<2x4x256xf32, #tpu.memory_space<vmem>>, vector<1x4x256xf32>
    %13 = vector.shape_cast %12 : vector<1x4x256xf32> to vector<4x256xf32>
    %cst_12 = arith.constant dense<0.000000e+00> : vector<8x256xf32>
    %14 = tpu.matmul %0, %13, %cst_12 {dimension_numbers = #tpu.dot_dimension_numbers<[1], [0], [0], [1], [0, 0, 1, 1], [], []>} : vector<8x4xf32>, vector<4x256xf32>, vector<8x256xf32> -> vector<8x256xf32>
    %15 = vector.broadcast %1 : vector<8x1xf32> to vector<8x256xf32>
    %16 = arith.addf %14, %15 : vector<8x256xf32>
    %cst_13 = arith.constant 0.000000e+00 : f32
    %17 = vector.broadcast %cst_13 : f32 to vector<8x256xf32>
    %18 = arith.maximumf %16, %17 : vector<8x256xf32>
    %c1_14 = arith.constant 1 : index
    %c0_15 = arith.constant 0 : index
    %c0_16 = arith.constant 0 : index
    %19 = vector.load %arg6[%c1_14, %c0_15, %c0_16] : memref<2x8x256xf32, #tpu.memory_space<vmem>>, vector<1x8x256xf32>
    %20 = vector.shape_cast %19 : vector<1x8x256xf32> to vector<8x256xf32>
    %21 = vector.shape_cast %18 : vector<8x256xf32> to vector<1x8x256xf32>
    tpu.vector_store %arg6[%c1_14, %c0_15, %c0_16], %21 {strides = array<i32>} : memref<2x8x256xf32, #tpu.memory_space<vmem>>, vector<1x8x256xf32>,
    return
  }
  func.func @transform_0(%arg0: i32, %arg1: i32, %arg2: i32) -> (i32, i32, i32) {
    %c0_i32 = arith.constant 0 : i32
    %c0_i32_0 = arith.constant 0 : i32
    return %arg2, %c0_i32, %arg0 : i32, i32, i32
  }
  func.func @transform_1(%arg0: i32, %arg1: i32, %arg2: i32) -> (i32, i32) {
    %c0_i32 = arith.constant 0 : i32
    %c0_i32_0 = arith.constant 0 : i32
    return %arg1, %c0_i32 : i32, i32
  }
  func.func @transform_2(%arg0: i32, %arg1: i32, %arg2: i32) -> (i32, i32) {
    %c0_i32 = arith.constant 0 : i32
    %c0_i32_0 = arith.constant 0 : i32
    return %arg1, %c0_i32 : i32, i32
  }
  func.func @transform_3(%arg0: i32, %arg1: i32, %arg2: i32) -> (i32, i32, i32) {
    %c0_i32 = arith.constant 0 : i32
    return %arg2, %arg1, %arg0 : i32, i32, i32
  }
}

</mosaic_0001>

<llo_original>
// kernel: tpu_custom_call.1
$region0: #{tpu_custom_call.1}
  #allocation0 [shape = 'u32[]', space=smem, size = 0x4, offset = 0x4, fixed_abs, tag = 'smem constant byte address 0x4 - core index']
  #allocation1 [shape = 'u32[72,128]{1,0:T(1,128)}', space=vmem, size = 0x9000, scoped, tag = 'internal scratch']
  %s0 = inlined_call_operand.vmem [shape: f32[2,4,256], index: 0, kind: input, shape index: {}]
  %s1 = inlined_call_operand.vmem [shape: f32[8,4], index: 1, kind: input, shape index: {}]
  %s2 = inlined_call_operand.vmem [shape: f32[8,1], index: 2, kind: input, shape index: {}]
  %s3 = inlined_call_operand.hbm [shape: f32[2,8,256], index: 3, kind: output, shape index: {}]
  %s4 = sld [smem:[#allocation0]]
  $region22: #{tpu_custom_call.1} parent=0
    _
  %s6 = ssub.s32 1, %s4
  %s7 = scalar_select 0, %s6, %s4
  $region1: #{tpu_custom_call.1} parent=0
    #allocation2 [shape = 'u8[16384]{0}', space=vmem, size = 0x4000, scoped, tag = 'output window, operand 0, single buffered']
    #allocation3 [shape = 's32[1]{0}', space=sflag, size = 0x4, scoped, tag = 'scoped memory for tpu_custom_call.1']
    %8 = vsyncpa [#allocation3], 0
    // Predicated region
    $region2: #{tpu_custom_call.1} parent=1 // pred_check
      _
    $region3: #{tpu_custom_call.1} parent=1 // pred_check_branch
      %10 = sbr.rel (0) target = $region5
    $region4: #{tpu_custom_call.1} parent=1 // pred_region
      _
    $region5: #{tpu_custom_call.1} parent=1 // pred_fallthru
      _
    // Predicated region
    $region6: #{tpu_custom_call.1} parent=1 // pred_check
      _
    $region7: #{tpu_custom_call.1} parent=1 // pred_check_branch
      %12 = sbr.rel (0) target = $region9
    $region8: #{tpu_custom_call.1} parent=1 // pred_region
      _
    $region9: #{tpu_custom_call.1} parent=1 // pred_fallthru
      _
    // Predicated region
    $region10: #{tpu_custom_call.1} parent=1 // pred_check
      _
    $region11: #{tpu_custom_call.1} parent=1 // pred_check_branch
      %14 = sbr.rel (0) target = $region13
    $region12: #{tpu_custom_call.1} parent=1 // pred_region
      _
    $region13: #{tpu_custom_call.1} parent=1 // pred_fallthru
      _
    %v15 = vld [vmem:[%s1] sm:$0xff]
    %v16 = vld [vmem:[%s2] sm:$0xff]
    %v17 = vld [vmem:[%s0] sm:$0xff]
    %19 = vset.pattern.permute.xlu0 0
    %20 = vperm.xlu0 %19, %v16
    %v21 = vpop.permute.xlu0 %20
    %24 = vst [vmem:[#allocation1] ss:$2 sm:$0xff] %v17
    %v25 = vld.sshfl [vmem:[#allocation1] sm:$0xff pattern:$0x75316420]
    %v26 = vld.sshfl [vmem:[#allocation1 + $0x8] sm:$0xff pattern:$0x75316420]
    %vm27 = vcmask 31744
    %v29 = vsel %vm27, %v15, 0
    %vm31 = vcmask 1043456
    %v32 = vsel %vm31, %v25, 0
    %v34 = vsel %vm31, %v26, 0
    %36 = vmatpush.msra.mxu0 0.0
    %37 = vmatpush.msra.mxu0 0.0
    %38 = vmatpush.msra.mxu0 0.0
    %39 = vmatpush.msra.mxu0 0.0
    %40 = vmatpush.msra.mxu0 0.0
    %41 = vmatpush.msra.mxu0 0.0
    %42 = vmatpush.msra.mxu0 0.0
    %43 = vmatpush.msra.mxu0 0.0
    %44 = vmatpush.msra.mxu0 0.0
    %45 = vmatpush.msra.mxu0 0.0
    %46 = vmatpush.msra.mxu0 0.0
    %47 = vmatpush.msra.mxu0 0.0
    %48 = vmatpush.msra.mxu0 0.0
    %49 = vmatpush.msra.mxu0 0.0
    %50 = vmatpush.msra.mxu0 0.0
    %51 = vmatpush.msra.mxu0 %v32
    %52 = vmatmul.f32.gmra.mxu0 %v29
    %v53 = vpop.f32.mrf.mxu0
    %v54 = vadd.f32 %v21, %v53
    %55 = vdwg.mxu0
    %56 = vmatpush.msra.mxu0 0.0
    %57 = vmatpush.msra.mxu0 0.0
    %58 = vmatpush.msra.mxu0 0.0
    %59 = vmatpush.msra.mxu0 0.0
    %60 = vmatpush.msra.mxu0 0.0
    %61 = vmatpush.msra.mxu0 0.0
    %62 = vmatpush.msra.mxu0 0.0
    %63 = vmatpush.msra.mxu0 0.0
    %64 = vmatpush.msra.mxu0 0.0
    %65 = vmatpush.msra.mxu0 0.0
    %66 = vmatpush.msra.mxu0 0.0
    %67 = vmatpush.msra.mxu0 0.0
    %68 = vmatpush.msra.mxu0 0.0
    %69 = vmatpush.msra.mxu0 0.0
    %70 = vmatpush.msra.mxu0 0.0
    %71 = vmatpush.msra.mxu0 %v34
    %72 = vmatmul.f32.gmra.mxu0 %v29
    %v73 = vpop.f32.mrf.mxu0
    %v74 = vadd.f32 %v21, %v73
    %75 = vdwg.mxu0
    %v76 = vmax.f32 %v54, 0.0
    %v77 = vmax.f32 %v74, 0.0
    %78 = vst [vmem:[#allocation2] sm:$0xff] %v76
    %79 = vst [vmem:[#allocation2 + $0x8] sm:$0xff] %v77
    %s80 = scalar_lea.vmem %s0, 8
    %v81 = vld [vmem:[%s80] sm:$0xff]
    %83 = vst [vmem:[#allocation1] ss:$2 sm:$0xff] %v81
    %v84 = vld.sshfl [vmem:[#allocation1] sm:$0xff pattern:$0x75316420]
    %v85 = vld.sshfl [vmem:[#allocation1 + $0x8] sm:$0xff pattern:$0x75316420]
    %v86 = vsel %vm31, %v84, 0
    %v88 = vsel %vm31, %v85, 0
    %90 = vmatpush.msra.mxu0 0.0
    %91 = vmatpush.msra.mxu0 0.0
    %92 = vmatpush.msra.mxu0 0.0
    %93 = vmatpush.msra.mxu0 0.0
    %94 = vmatpush.msra.mxu0 0.0
    %95 = vmatpush.msra.mxu0 0.0
    %96 = vmatpush.msra.mxu0 0.0
    %97 = vmatpush.msra.mxu0 0.0
    %98 = vmatpush.msra.mxu0 0.0
    %99 = vmatpush.msra.mxu0 0.0
    %100 = vmatpush.msra.mxu0 0.0
    %101 = vmatpush.msra.mxu0 0.0
    %102 = vmatpush.msra.mxu0 0.0
    %103 = vmatpush.msra.mxu0 0.0
    %104 = vmatpush.msra.mxu0 0.0
    %105 = vmatpush.msra.mxu0 %v86
    %106 = vmatmul.f32.gmra.mxu0 %v29
    %v107 = vpop.f32.mrf.mxu0
    %v108 = vadd.f32 %v21, %v107
    %109 = vdwg.mxu0
    %110 = vmatpush.msra.mxu0 0.0
    %111 = vmatpush.msra.mxu0 0.0
    %112 = vmatpush.msra.mxu0 0.0
    %113 = vmatpush.msra.mxu0 0.0
    %114 = vmatpush.msra.mxu0 0.0
    %115 = vmatpush.msra.mxu0 0.0
    %116 = vmatpush.msra.mxu0 0.0
    %117 = vmatpush.msra.mxu0 0.0
    %118 = vmatpush.msra.mxu0 0.0
    %119 = vmatpush.msra.mxu0 0.0
    %120 = vmatpush.msra.mxu0 0.0
    %121 = vmatpush.msra.mxu0 0.0
    %122 = vmatpush.msra.mxu0 0.0
    %123 = vmatpush.msra.mxu0 0.0
    %124 = vmatpush.msra.mxu0 0.0
    %125 = vmatpush.msra.mxu0 %v88
    %126 = vmatmul.f32.gmra.mxu0 %v29
    %v127 = vpop.f32.mrf.mxu0
    %v128 = vadd.f32 %v21, %v127
    %129 = vdwg.mxu0
    %v130 = vmax.f32 %v108, 0.0
    %v131 = vmax.f32 %v128, 0.0
    %s132 = scalar_lea.vmem [#allocation2], 16
    %133 = vst [vmem:[%s132] sm:$0xff] %v130
    %134 = vst [vmem:[%s132 + $0x8] sm:$0xff] %v131
    // Predicated region
    $region14: #{tpu_custom_call.1} parent=1 // pred_check
      _
    $region15: #{tpu_custom_call.1} parent=1 // pred_check_branch
      %136 = sbr.rel (0) target = $region17
    $region16: #{tpu_custom_call.1} parent=1 // pred_region
      %138 = vsyncadd [#allocation3], 0
      %s139 = sshll.u32 [#allocation2], 4
      %s140 = int_to_ptr.vmem [resolvable:$true] %s139
      %s141 = sshll.u32 %s3, 4
      %s142 = int_to_ptr.hbm [resolvable:$true] %s141
      %147 = dma.vmem_to_hbm [thread:$0]  %s140, 512, %s142, [#allocation3], 256, 256, 16
    $region17: #{tpu_custom_call.1} parent=1 // pred_fallthru
      _
    // Predicated region
    $region18: #{tpu_custom_call.1} parent=1 // pred_check
      _
    $region19: #{tpu_custom_call.1} parent=1 // pred_check_branch
      %149 = sbr.rel (0) target = $region21
    $region20: #{tpu_custom_call.1} parent=1 // pred_region
      %151 = dma.done [#allocation3], 512
    $region21: #{tpu_custom_call.1} parent=1 // pred_fallthru
      _
    %152 = vsyncpa [#allocation3], 1

</llo_original>
